<compile_context>
chip_gen: v6e
topology: v6e:2x2x1
jax: 0.10.0
libtpu: 0.0.40
codegen_flags: <defaults>
</compile_context>

<pallas_src>
import functools

import jax
import jax.numpy as jnp
from jax import lax
from jax.experimental import pallas as pl
from jax.experimental.pallas import tpu as pltpu


def _round_up(x, m):
    return ((x + m - 1) // m) * m


def _vmem_capacity_bytes():
    """Per-core VMEM capacity; falls back to 128 MiB (v5e/v6e) if unknown."""
    try:
        return int(pltpu.get_tpu_info().vmem_capacity_bytes)
    except Exception:
        return 128 << 20


def _layer_norm_f32(z, gamma_f32, beta_f32, eps):
    """Two-pass LayerNorm over the last axis, all f32."""
    inv_h = 1.0 / z.shape[-1]
    mean = jnp.sum(z, axis=-1, keepdims=True) * inv_h
    zc = z - mean
    var = jnp.sum(zc * zc, axis=-1, keepdims=True) * inv_h
    return zc * lax.rsqrt(var + eps) * gamma_f32 + beta_f32


def _epilogue(acc_f32, params_ref, res_ref, o_ref, eps):
    # params_ref rows: 0 = bias, 1 = gamma, 2 = beta (rows 3..7 are padding).
    bias = params_ref[0:1, :].astype(jnp.float32)
    gamma = params_ref[1:2, :].astype(jnp.float32)
    beta = params_ref[2:3, :].astype(jnp.float32)
    # dropout: identity in inference mode.
    # TODO(synk): training-mode dropout (pltpu.prng_seed + pltpu.prng_random_bits).
    z = acc_f32 + bias + res_ref[...].astype(jnp.float32)
    o_ref[...] = _layer_norm_f32(z, gamma, beta, eps).astype(o_ref.dtype)


def _resident_kernel(x_ref, w_ref, params_ref, res_ref, o_ref, *, eps):
    # x_ref: (tm, H); w_ref: (H_in, H_out) resident; params_ref: (8, H);
    # res_ref / o_ref: (tm, H).  Native-dtype MXU feed, f32 accumulation.
    acc = jnp.dot(x_ref[...], w_ref[...], preferred_element_type=jnp.float32)
    _epilogue(acc, params_ref, res_ref, o_ref, eps)


def _ktiled_kernel(x_ref, w_ref, params_ref, res_ref, o_ref, acc_ref, *, eps):
    # x_ref: (tm, tk); w_ref: (tk, H) contiguous rows of the (in, out) weight;
    # acc_ref: (tm, H) f32 VMEM accumulator.
    k = pl.program_id(1)

    @pl.when(k == 0)
    def _():
        acc_ref[...] = jnp.zeros_like(acc_ref)

    acc_ref[...] += jnp.dot(x_ref[...], w_ref[...],
                            preferred_element_type=jnp.float32)

    @pl.when(k == pl.num_programs(1) - 1)
    def _():
        _epilogue(acc_ref[...], params_ref, res_ref, o_ref, eps)


def _pick_tile_m(m, h):
    """Row tile: floored at 256 where M allows, ~8 MiB of f32 per (tile_m, H)
    tile, >= 2 grid steps for megacore / 2-TC splitting, never 8/16/32 rows."""
    budget_rows = max(256, (8 << 20) // max(4 * h, 1))
    tile = max(256, min(1024, (budget_rows // 256) * 256))
    while tile > 256 and -(-m // tile) < 2:
        tile -= 256
    if m < tile:
        # Small-M case: a single padded tile, rounded to a multiple of 64
        # (covers f32 (8,128) / bf16 (16,128) / int8 (32,128) sublane packing).
        tile = min(tile, _round_up(max(m, 1), 64))
    return tile


def _pick_k_tile(h, w_itemsize, vmem_cap):
    """Largest multiple-of-128 divisor of H whose double-buffered (k_tile, H)
    weight slice fits ~1/4 of per-core VMEM; falls back to the smallest one."""
    if h % 128 != 0:
        return None
    budget = max(vmem_cap // 4, 4 << 20)
    cands = [c for c in range(128, h + 1, 128) if h % c == 0]
    fitting = [c for c in cands if 2 * c * h * w_itemsize <= budget]
    return max(fitting) if fitting else min(cands)


def prepare_weight(w_out_in):
    """One-time conversion of a PyTorch nn.Linear weight (out, in) to the
    (in, out) layout the kernel uses (natural NN MXU feed, contiguous K-slices).
    Do this once at parameter-load time, not per forward call."""
    return jnp.asarray(w_out_in).T


def layout_self_output(hidden_states, input_tensor, w_in_out, b, gamma, beta,
                       *, eps=1e-6, tile_m=None, k_tile=None):
    """Fused dense + (eval) dropout + residual add + LayerNorm.

    hidden_states, input_tensor: [B, S, H]
    w_in_out: [H_in, H_out]  (use prepare_weight() on a PyTorch (out, in) weight)
    b, gamma, beta: [H]
    """
    B, S, H = hidden_states.shape
    M = B * S
    vmem_cap = _vmem_capacity_bytes()

    x2 = hidden_states.reshape(M, H)
    r2 = input_tensor.reshape(M, H)
    # Fuse bias/gamma/beta into one grid-invariant (8, H) operand.
    params = jnp.pad(jnp.stack([b, gamma, beta]).astype(jnp.float32),
                     ((0, 5), (0, 0)))

    if tile_m is None:
        tile_m = _pick_tile_m(M, H)
    assert tile_m % 8 == 0, "tile_m must be a multiple of 8"
    M_pad = _round_up(M, tile_m)
    if M_pad != M:
        pad = M_pad - M
        x2 = jnp.pad(x2, ((0, pad), (0, 0)))
        r2 = jnp.pad(r2, ((0, pad), (0, 0)))

    in_dtype = hidden_states.dtype
    itemsize = jnp.dtype(in_dtype).itemsize
    w_itemsize = jnp.dtype(w_in_out.dtype).itemsize
    w_bytes = H * H * w_itemsize

    # Generation-aware switch: keep the (single-buffered) weight resident while
    # it fits ~30% of per-core VMEM (~38 MiB on v5e/v6e, ~19 MiB on v7x).
    if k_tile is None and w_bytes > int(0.30 * vmem_cap):
        k_tile = _pick_k_tile(H, w_itemsize, vmem_cap)
    if k_tile is not None:
        assert H % k_tile == 0 and k_tile % 128 == 0, \
            "k_tile must be a multiple of 128 that divides H"

    num_row_tiles = M_pad // tile_m
    flops = 2 * M_pad * H * H + 8 * M_pad * H
    w_reads = 1 if k_tile is None else num_row_tiles
    bytes_accessed = 3 * M_pad * H * itemsize + w_reads * w_bytes + 8 * H * 4
    try:
        cost = pl.CostEstimate(flops=flops, transcendentals=M_pad,
                               bytes_accessed=bytes_accessed)
    except Exception:
        cost = None

    def _build_and_call(single_buffer_invariants):
        inv_mode = ({"pipeline_mode": pl.Buffered(1)}
                    if single_buffer_invariants else {})
        if k_tile is None:
            # --- resident-weight path ----------------------------------------
            grid = (num_row_tiles,)
            kernel = functools.partial(_resident_kernel, eps=eps)
            in_specs = [
                pl.BlockSpec((tile_m, H), lambda i: (i, 0)),           # x rows
                pl.BlockSpec((H, H), lambda i: (0, 0), **inv_mode),    # weight
                pl.BlockSpec((8, H), lambda i: (0, 0), **inv_mode),    # b/gamma/beta
                pl.BlockSpec((tile_m, H), lambda i: (i, 0)),           # residual
            ]
            out_specs = pl.BlockSpec((tile_m, H), lambda i: (i, 0))
            scratch_shapes = []
            dim_sem = ("parallel",)
            w_bufs = 1 if single_buffer_invariants else 2
            vmem_est = (w_bufs * w_bytes
                        + 2 * 2 * tile_m * H * itemsize    # x + residual (2-buf)
                        + 2 * tile_m * H * itemsize        # output (2-buf)
                        + 2 * 8 * H * 4)                   # fused params
        else:
            # --- K-tiled accumulator path --------------------------------------
            grid = (num_row_tiles, H // k_tile)
            kernel = functools.partial(_ktiled_kernel, eps=eps)
            in_specs = [
                pl.BlockSpec((tile_m, k_tile), lambda i, k: (i, k)),     # x slice
                pl.BlockSpec((k_tile, H), lambda i, k: (k, 0)),          # W rows
                pl.BlockSpec((8, H), lambda i, k: (0, 0), **inv_mode),   # b/gamma/beta
                pl.BlockSpec((tile_m, H), lambda i, k: (i, 0)),          # residual
            ]
            out_specs = pl.BlockSpec((tile_m, H), lambda i, k: (i, 0))
            scratch_shapes = [pltpu.VMEM((tile_m, H), jnp.float32)]
            dim_sem = ("parallel", "arbitrary")
            vmem_est = (2 * k_tile * H * w_itemsize        # weight slices (2-buf)
                        + 2 * tile_m * k_tile * itemsize   # x slices (2-buf)
                        + 2 * tile_m * H * itemsize        # residual (2-buf)
                        + 2 * tile_m * H * itemsize        # output (2-buf)
                        + tile_m * H * 4                   # f32 accumulator
                        + 2 * 8 * H * 4)

        # Cap the request well below physical VMEM (leaves compiler headroom;
        # stays < 64 MiB on v7x, may exceed 64 MiB on 128 MiB v5e/v6e parts).
        vmem_limit = max(16 << 20,
                         min(int(vmem_est * 1.4) + (2 << 20),
                             int(vmem_cap * 0.85)))

        return pl.pallas_call(
            kernel,
            out_shape=jax.ShapeDtypeStruct((M_pad, H), in_dtype),
            grid_spec=pltpu.PrefetchScalarGridSpec(
                num_scalar_prefetch=0,
                grid=grid,
                in_specs=in_specs,
                out_specs=out_specs,
                scratch_shapes=scratch_shapes,
            ),
            compiler_params=pltpu.CompilerParams(
                dimension_semantics=dim_sem,
                vmem_limit_bytes=vmem_limit),
            cost_estimate=cost,
        )(x2, w_in_out, params, r2)

    try:
        out = _build_and_call(True)
    except Exception:
        # pl.Buffered(1) single-buffering of grid-invariant operands is not
        # available on every jax/Mosaic version; fall back to default buffering.
        out = _build_and_call(False)

    if M_pad != M:
        out = out[:M]
    return out.reshape(B, S, H)


def _reference(hidden_states, input_tensor, w_out_in, b, gamma, beta, eps=1e-6):
    y = jnp.einsum("bsh,oh->bso", hidden_states, w_out_in,
                   precision=jax.lax.Precision.HIGHEST) + b
    z = y + input_tensor
    mean = jnp.mean(z, axis=-1, keepdims=True)
    var = jnp.mean((z - mean) ** 2, axis=-1, keepdims=True)
    return (z - mean) * lax.rsqrt(var + eps) * gamma + beta


if __name__ == "__main__":
    key = jax.random.PRNGKey(0)
    # Matches LayoutModelConfig defaults: hidden_size=256, layer_norm_eps=1e-6.
    B, S, H = 2, 8, 256
    eps = 1e-6

    k1, k2, k3, k4 = jax.random.split(key, 4)
    hidden_states = jax.random.normal(k1, (B, S, H), dtype=jnp.float32)
    input_tensor = jax.random.normal(k2, (B, S, H), dtype=jnp.float32)

    # Deterministic synthetic parameters (nn.Linear / nn.LayerNorm shapes).
    initializer_range = 0.02
    w = initializer_range * jax.random.normal(k3, (H, H), dtype=jnp.float32)  # (out, in)
    b = 0.01 * jax.random.normal(k4, (H,), dtype=jnp.float32)
    gamma = jnp.ones((H,), dtype=jnp.float32)
    beta = jnp.zeros((H,), dtype=jnp.float32)

    # One-time weight layout conversion (amortized over all calls in practice).
    w_t = prepare_weight(w)

    ref = _reference(hidden_states, input_tensor, w, b, gamma, beta, eps=eps)

    # Resident-weight path (auto-selected at this hidden size).
    out = layout_self_output(hidden_states, input_tensor, w_t, b, gamma, beta,
                             eps=eps)
    out = jax.block_until_ready(out)
    assert out.shape == (B, S, H)
    assert jnp.allclose(out, ref, atol=2e-4, rtol=2e-4), "resident path mismatch"

    # K-tiled accumulator path (auto-selected for large H / small-VMEM parts);
    # force it at the small demo shape to validate it as well.
    out_kt = layout_self_output(hidden_states, input_tensor, w_t, b, gamma,
                                beta, eps=eps, k_tile=128)
    out_kt = jax.block_until_ready(out_kt)
    assert jnp.allclose(out_kt, ref, atol=2e-4, rtol=2e-4), "k-tiled path mismatch"

    print("KERNEL_OK")
</pallas_src>

<mosaic_0001>
module attributes {stable_mosaic.version = 11 : i64} {
  func.func @_resident_kernel(%arg0: i32, %arg1: memref<64x256xf32, #tpu.memory_space<vmem>>, %arg2: memref<256x256xf32, #tpu.memory_space<vmem>>, %arg3: memref<8x256xf32, #tpu.memory_space<vmem>>, %arg4: memref<64x256xf32, #tpu.memory_space<vmem>>, %arg5: memref<64x256xf32, #tpu.memory_space<vmem>>) attributes {dimension_semantics = [#tpu.dimension_semantics<parallel>], iteration_bounds = array<i64: 1>, scalar_prefetch = 0 : i64, scratch_operands = 0 : i64, tpu.core_type = #tpu.core_type<tc>, window_params = [{transform_indices = @transform_0, window_bounds = array<i64: 64, 256>}, {pipeline_mode = #tpu.pipeline_mode<synchronous>, transform_indices = @transform_1, window_bounds = array<i64: 256, 256>}, {pipeline_mode = #tpu.pipeline_mode<synchronous>, transform_indices = @transform_2, window_bounds = array<i64: 8, 256>}, {transform_indices = @transform_3, window_bounds = array<i64: 64, 256>}, {transform_indices = @transform_4, window_bounds = array<i64: 64, 256>}]} {
    %c0 = arith.constant 0 : index
    %c0_0 = arith.constant 0 : index
    %0 = vector.load %arg1[%c0, %c0_0] : memref<64x256xf32, #tpu.memory_space<vmem>>, vector<64x256xf32>
    %c0_1 = arith.constant 0 : index
    %c0_2 = arith.constant 0 : index
    %1 = vector.load %arg2[%c0_1, %c0_2] : memref<256x256xf32, #tpu.memory_space<vmem>>, vector<256x256xf32>
    %cst = arith.constant dense<0.000000e+00> : vector<64x256xf32>
    %2 = tpu.matmul %0, %1, %cst {dimension_numbers = #tpu.dot_dimension_numbers<[1], [0], [0], [1], [0, 0, 1, 1], [], []>} : vector<64x256xf32>, vector<256x256xf32>, vector<64x256xf32> -> vector<64x256xf32>
    %c0_3 = arith.constant 0 : index
    %c0_4 = arith.constant 0 : index
    %3 = vector.load %arg3[%c0_3, %c0_4] : memref<8x256xf32, #tpu.memory_space<vmem>>, vector<1x256xf32>
    %c1 = arith.constant 1 : index
    %c0_5 = arith.constant 0 : index
    %4 = vector.load %arg3[%c1, %c0_5] : memref<8x256xf32, #tpu.memory_space<vmem>>, vector<1x256xf32>
    %c2 = arith.constant 2 : index
    %c0_6 = arith.constant 0 : index
    %5 = vector.load %arg3[%c2, %c0_6] : memref<8x256xf32, #tpu.memory_space<vmem>>, vector<1x256xf32>
    %6 = vector.broadcast %3 : vector<1x256xf32> to vector<64x256xf32>
    %7 = arith.addf %2, %6 : vector<64x256xf32>
    %c0_7 = arith.constant 0 : index
    %c0_8 = arith.constant 0 : index
    %8 = vector.load %arg4[%c0_7, %c0_8] : memref<64x256xf32, #tpu.memory_space<vmem>>, vector<64x256xf32>
    %9 = arith.addf %7, %8 : vector<64x256xf32>
    %cst_9 = arith.constant dense<0.000000e+00> : vector<64xf32>
    %10 = vector.multi_reduction <add>, %9, %cst_9 [1] : vector<64x256xf32> to vector<64xf32>
    %11 = vector.shape_cast %10 : vector<64xf32> to vector<64x1xf32>
    %cst_10 = arith.constant 3.906250e-03 : f32
    %12 = vector.broadcast %cst_10 : f32 to vector<64x1xf32>
    %13 = arith.mulf %11, %12 : vector<64x1xf32>
    %14 = vector.broadcast %13 : vector<64x1xf32> to vector<64x256xf32>
    %15 = arith.subf %9, %14 : vector<64x256xf32>
    %16 = arith.mulf %15, %15 : vector<64x256xf32>
    %cst_11 = arith.constant dense<0.000000e+00> : vector<64xf32>
    %17 = vector.multi_reduction <add>, %16, %cst_11 [1] : vector<64x256xf32> to vector<64xf32>
    %18 = vector.shape_cast %17 : vector<64xf32> to vector<64x1xf32>
    %cst_12 = arith.constant 3.906250e-03 : f32
    %19 = vector.broadcast %cst_12 : f32 to vector<64x1xf32>
    %20 = arith.mulf %18, %19 : vector<64x1xf32>
    %cst_13 = arith.constant 9.99999997E-7 : f32
    %21 = vector.broadcast %cst_13 : f32 to vector<64x1xf32>
    %22 = arith.addf %20, %21 : vector<64x1xf32>
    %23 = math.rsqrt %22 : vector<64x1xf32>
    %24 = vector.broadcast %23 : vector<64x1xf32> to vector<64x256xf32>
    %25 = arith.mulf %15, %24 : vector<64x256xf32>
    %26 = vector.broadcast %4 : vector<1x256xf32> to vector<64x256xf32>
    %27 = arith.mulf %25, %26 : vector<64x256xf32>
    %28 = vector.broadcast %5 : vector<1x256xf32> to vector<64x256xf32>
    %29 = arith.addf %27, %28 : vector<64x256xf32>
    %c0_14 = arith.constant 0 : index
    %c0_15 = arith.constant 0 : index
    %30 = vector.load %arg5[%c0_14, %c0_15] : memref<64x256xf32, #tpu.memory_space<vmem>>, vector<64x256xf32>
    tpu.vector_store %arg5[%c0_14, %c0_15], %29 {strides = array<i32>} : memref<64x256xf32, #tpu.memory_space<vmem>>, vector<64x256xf32>,
    return
  }
  func.func @transform_0(%arg0: i32) -> (i32, i32) {
    %c0_i32 = arith.constant 0 : i32
    %c0_i32_0 = arith.constant 0 : i32
    return %arg0, %c0_i32 : i32, i32
  }
  func.func @transform_1(%arg0: i32) -> (i32, i32) {
    %c0_i32 = arith.constant 0 : i32
    %c0_i32_0 = arith.constant 0 : i32
    %c0_i32_1 = arith.constant 0 : i32
    return %c0_i32, %c0_i32_0 : i32, i32
  }
  func.func @transform_2(%arg0: i32) -> (i32, i32) {
    %c0_i32 = arith.constant 0 : i32
    %c0_i32_0 = arith.constant 0 : i32
    %c0_i32_1 = arith.constant 0 : i32
    return %c0_i32, %c0_i32_0 : i32, i32
  }
  func.func @transform_3(%arg0: i32) -> (i32, i32) {
    %c0_i32 = arith.constant 0 : i32
    %c0_i32_0 = arith.constant 0 : i32
    return %arg0, %c0_i32 : i32, i32
  }
  func.func @transform_4(%arg0: i32) -> (i32, i32) {
    %c0_i32 = arith.constant 0 : i32
    %c0_i32_0 = arith.constant 0 : i32
    return %arg0, %c0_i32 : i32, i32
  }
}

module attributes {stable_mosaic.version = 11 : i64} {
  func.func @_resident_kernel(%arg0: i32, %arg1: memref<64x256xf32, #tpu.memory_space<vmem>>, %arg2: memref<256x256xf32, #tpu.memory_space<vmem>>, %arg3: memref<8x256xf32, #tpu.memory_space<vmem>>, %arg4: memref<64x256xf32, #tpu.memory_space<vmem>>, %arg5: memref<64x256xf32, #tpu.memory_space<vmem>>) attributes {dimension_semantics = [#tpu.dimension_semantics<parallel>], iteration_bounds = array<i64: 1>, scalar_prefetch = 0 : i64, scratch_operands = 0 : i64, tpu.core_type = #tpu.core_type<tc>, window_params = [{transform_indices = @transform_0, window_bounds = array<i64: 64, 256>}, {pipeline_mode = #tpu.pipeline_mode<synchronous>, transform_indices = @transform_1, window_bounds = array<i64: 256, 256>}, {pipeline_mode = #tpu.pipeline_mode<synchronous>, transform_indices = @transform_2, window_bounds = array<i64: 8, 256>}, {transform_indices = @transform_3, window_bounds = array<i64: 64, 256>}, {transform_indices = @transform_4, window_bounds = array<i64: 64, 256>}]} {
    %c0 = arith.constant 0 : index
    %c0_0 = arith.constant 0 : index
    %0 = vector.load %arg1[%c0, %c0_0] : memref<64x256xf32, #tpu.memory_space<vmem>>, vector<64x256xf32>
    %c0_1 = arith.constant 0 : index
    %c0_2 = arith.constant 0 : index
    %1 = vector.load %arg2[%c0_1, %c0_2] : memref<256x256xf32, #tpu.memory_space<vmem>>, vector<256x256xf32>
    %cst = arith.constant dense<0.000000e+00> : vector<64x256xf32>
    %2 = tpu.matmul %0, %1, %cst {dimension_numbers = #tpu.dot_dimension_numbers<[1], [0], [0], [1], [0, 0, 1, 1], [], []>} : vector<64x256xf32>, vector<256x256xf32>, vector<64x256xf32> -> vector<64x256xf32>
    %c0_3 = arith.constant 0 : index
    %c0_4 = arith.constant 0 : index
    %3 = vector.load %arg3[%c0_3, %c0_4] : memref<8x256xf32, #tpu.memory_space<vmem>>, vector<1x256xf32>
    %c1 = arith.constant 1 : index
    %c0_5 = arith.constant 0 : index
    %4 = vector.load %arg3[%c1, %c0_5] : memref<8x256xf32, #tpu.memory_space<vmem>>, vector<1x256xf32>
    %c2 = arith.constant 2 : index
    %c0_6 = arith.constant 0 : index
    %5 = vector.load %arg3[%c2, %c0_6] : memref<8x256xf32, #tpu.memory_space<vmem>>, vector<1x256xf32>
    %6 = vector.broadcast %3 : vector<1x256xf32> to vector<64x256xf32>
    %7 = arith.addf %2, %6 : vector<64x256xf32>
    %c0_7 = arith.constant 0 : index
    %c0_8 = arith.constant 0 : index
    %8 = vector.load %arg4[%c0_7, %c0_8] : memref<64x256xf32, #tpu.memory_space<vmem>>, vector<64x256xf32>
    %9 = arith.addf %7, %8 : vector<64x256xf32>
    %cst_9 = arith.constant dense<0.000000e+00> : vector<64xf32>
    %10 = vector.multi_reduction <add>, %9, %cst_9 [1] : vector<64x256xf32> to vector<64xf32>
    %11 = vector.shape_cast %10 : vector<64xf32> to vector<64x1xf32>
    %cst_10 = arith.constant 3.906250e-03 : f32
    %12 = vector.broadcast %cst_10 : f32 to vector<64x1xf32>
    %13 = arith.mulf %11, %12 : vector<64x1xf32>
    %14 = vector.broadcast %13 : vector<64x1xf32> to vector<64x256xf32>
    %15 = arith.subf %9, %14 : vector<64x256xf32>
    %16 = arith.mulf %15, %15 : vector<64x256xf32>
    %cst_11 = arith.constant dense<0.000000e+00> : vector<64xf32>
    %17 = vector.multi_reduction <add>, %16, %cst_11 [1] : vector<64x256xf32> to vector<64xf32>
    %18 = vector.shape_cast %17 : vector<64xf32> to vector<64x1xf32>
    %cst_12 = arith.constant 3.906250e-03 : f32
    %19 = vector.broadcast %cst_12 : f32 to vector<64x1xf32>
    %20 = arith.mulf %18, %19 : vector<64x1xf32>
    %cst_13 = arith.constant 9.99999997E-7 : f32
    %21 = vector.broadcast %cst_13 : f32 to vector<64x1xf32>
    %22 = arith.addf %20, %21 : vector<64x1xf32>
    %23 = math.rsqrt %22 : vector<64x1xf32>
    %24 = vector.broadcast %23 : vector<64x1xf32> to vector<64x256xf32>
    %25 = arith.mulf %15, %24 : vector<64x256xf32>
    %26 = vector.broadcast %4 : vector<1x256xf32> to vector<64x256xf32>
    %27 = arith.mulf %25, %26 : vector<64x256xf32>
    %28 = vector.broadcast %5 : vector<1x256xf32> to vector<64x256xf32>
    %29 = arith.addf %27, %28 : vector<64x256xf32>
    %c0_14 = arith.constant 0 : index
    %c0_15 = arith.constant 0 : index
    %30 = vector.load %arg5[%c0_14, %c0_15] : memref<64x256xf32, #tpu.memory_space<vmem>>, vector<64x256xf32>
    tpu.vector_store %arg5[%c0_14, %c0_15], %29 {strides = array<i32>} : memref<64x256xf32, #tpu.memory_space<vmem>>, vector<64x256xf32>,
    return
  }
  func.func @transform_0(%arg0: i32) -> (i32, i32) {
    %c0_i32 = arith.constant 0 : i32
    %c0_i32_0 = arith.constant 0 : i32
    return %arg0, %c0_i32 : i32, i32
  }
  func.func @transform_1(%arg0: i32) -> (i32, i32) {
    %c0_i32 = arith.constant 0 : i32
    %c0_i32_0 = arith.constant 0 : i32
    %c0_i32_1 = arith.constant 0 : i32
    return %c0_i32, %c0_i32_0 : i32, i32
  }
  func.func @transform_2(%arg0: i32) -> (i32, i32) {
    %c0_i32 = arith.constant 0 : i32
    %c0_i32_0 = arith.constant 0 : i32
    %c0_i32_1 = arith.constant 0 : i32
    return %c0_i32, %c0_i32_0 : i32, i32
  }
  func.func @transform_3(%arg0: i32) -> (i32, i32) {
    %c0_i32 = arith.constant 0 : i32
    %c0_i32_0 = arith.constant 0 : i32
    return %arg0, %c0_i32 : i32, i32
  }
  func.func @transform_4(%arg0: i32) -> (i32, i32) {
    %c0_i32 = arith.constant 0 : i32
    %c0_i32_0 = arith.constant 0 : i32
    return %arg0, %c0_i32 : i32, i32
  }
}

</mosaic_0001>

<llo_original>
// kernel: tpu_custom_call.1
$region0: #{tpu_custom_call.1}
  #allocation0 [shape = 'u32[]', space=smem, size = 0x4, offset = 0x4, fixed_abs, tag = 'smem constant byte address 0x4 - core index']
  #allocation1 [shape = 'u32[144,128]{1,0:T(1,128)}', space=vmem, size = 0x12000, scoped, tag = 'internal scratch']
  %s0 = inlined_call_operand.hbm [shape: f32[64,256], index: 0, kind: input, shape index: {}]
  %s1 = inlined_call_operand.hbm [shape: f32[256,256], index: 1, kind: input, shape index: {}]
  %s2 = inlined_call_operand.hbm [shape: f32[8,256], index: 2, kind: input, shape index: {}]
  %s3 = inlined_call_operand.hbm [shape: f32[64,256], index: 3, kind: input, shape index: {}]
  %s4 = inlined_call_operand.hbm [shape: f32[64,256], index: 4, kind: output, shape index: {}]
  %s5 = sld [smem:[#allocation0]]
  $region42: #{tpu_custom_call.1} parent=0
    _
  %s7 = ssub.s32 1, %s5
  %s8 = scalar_select 0, %s7, %s5
  $region1: #{tpu_custom_call.1} parent=0
    #allocation2 [shape = 'u8[65536]{0}', space=vmem, size = 0x10000, scoped, tag = 'input window, operand 0, single buffered']
    #allocation3 [shape = 's32[1]{0}', space=sflag, size = 0x4, scoped, tag = 'scoped memory for tpu_custom_call.1']
    #allocation4 [shape = 's32[1]{0}', space=sflag, size = 0x4, scoped, tag = 'scoped memory for tpu_custom_call.1']
    #allocation5 [shape = 'u8[262144]{0}', space=vmem, size = 0x40000, scoped, tag = 'input window, operand 1, single buffered']
    #allocation6 [shape = 's32[1]{0}', space=sflag, size = 0x4, scoped, tag = 'scoped memory for tpu_custom_call.1']
    #allocation7 [shape = 'u8[8192]{0}', space=vmem, size = 0x2000, scoped, tag = 'input window, operand 2, single buffered']
    #allocation8 [shape = 'u8[65536]{0}', space=vmem, size = 0x10000, scoped, tag = 'input window, operand 3, single buffered']
    #allocation9 [shape = 's32[1]{0}', space=sflag, size = 0x4, scoped, tag = 'scoped memory for tpu_custom_call.1']
    #allocation10 [shape = 'u8[65536]{0}', space=vmem, size = 0x10000, scoped, tag = 'output window, operand 0, single buffered']
    %9 = vsyncpa [#allocation3], 0
    %10 = vsyncpa [#allocation6], 0
    %11 = vsyncpa [#allocation9], 0
    %12 = vsyncpa [#allocation4], 0
    // Predicated region
    $region2: #{tpu_custom_call.1} parent=1 // pred_check
      _
    $region3: #{tpu_custom_call.1} parent=1 // pred_check_branch
      %14 = sbr.rel (0) target = $region5
    $region4: #{tpu_custom_call.1} parent=1 // pred_region
      %s16 = ssub.s32 2048, 2048
      %17 = vsyncadd [#allocation3], %s16
      %s18 = sshll.u32 [#allocation2], 4
      %s19 = int_to_ptr.vmem [resolvable:$true] %s18
      %24 = dma.hbm_to_vmem [thread:$0]  %s0, 2048, %s19, [#allocation3], 256, 256, 16
    $region5: #{tpu_custom_call.1} parent=1 // pred_fallthru
      _
    // Predicated region
    $region6: #{tpu_custom_call.1} parent=1 // pred_check
      _
    $region7: #{tpu_custom_call.1} parent=1 // pred_check_branch
      %26 = sbr.rel (0) target = $region9
    $region8: #{tpu_custom_call.1} parent=1 // pred_region
      %s28 = ssub.s32 8192, 8192
      %29 = vsyncadd [#allocation6], %s28
      %s30 = sshll.u32 [#allocation5], 4
      %s31 = int_to_ptr.vmem [resolvable:$true] %s30
      %36 = dma.hbm_to_vmem [thread:$0]  %s1, 8192, %s31, [#allocation6], 256, 256, 16
    $region9: #{tpu_custom_call.1} parent=1 // pred_fallthru
      _
    // Predicated region
    $region10: #{tpu_custom_call.1} parent=1 // pred_check
      _
    $region11: #{tpu_custom_call.1} parent=1 // pred_check_branch
      %38 = sbr.rel (0) target = $region13
    $region12: #{tpu_custom_call.1} parent=1 // pred_region
      %s40 = ssub.s32 256, 256
      %41 = vsyncadd [#allocation6], %s40
      %s43 = sshll.u32 [#allocation7], 4
      %s44 = int_to_ptr.vmem [resolvable:$true] %s43
      %46 = dma.hbm_to_vmem [thread:$0]  %s2, 256, %s44, [#allocation6]
    $region13: #{tpu_custom_call.1} parent=1 // pred_fallthru
      _
    // Predicated region
    $region14: #{tpu_custom_call.1} parent=1 // pred_check
      _
    $region15: #{tpu_custom_call.1} parent=1 // pred_check_branch
      %48 = sbr.rel (0) target = $region17
    $region16: #{tpu_custom_call.1} parent=1 // pred_region
      %s50 = ssub.s32 2048, 2048
      %51 = vsyncadd [#allocation9], %s50
      %s52 = sshll.u32 [#allocation8], 4
      %s53 = int_to_ptr.vmem [resolvable:$true] %s52
      %58 = dma.hbm_to_vmem [thread:$0]  %s3, 2048, %s53, [#allocation9], 256, 256, 16
    $region17: #{tpu_custom_call.1} parent=1 // pred_fallthru
      _
    // Predicated region
    $region18: #{tpu_custom_call.1} parent=1 // pred_check
      _
    $region19: #{tpu_custom_call.1} parent=1 // pred_check_branch
      %60 = sbr.rel (0) target = $region21
    $region20: #{tpu_custom_call.1} parent=1 // pred_region
      %61 = dma.done [#allocation3], 2048
    $region21: #{tpu_custom_call.1} parent=1 // pred_fallthru
      _
    // Predicated region
    $region22: #{tpu_custom_call.1} parent=1 // pred_check
      _
    $region23: #{tpu_custom_call.1} parent=1 // pred_check_branch
      %63 = sbr.rel (0) target = $region25
    $region24: #{tpu_custom_call.1} parent=1 // pred_region
      %64 = dma.done [#allocation6], 8192
    $region25: #{tpu_custom_call.1} parent=1 // pred_fallthru
      _
    // Predicated region
    $region26: #{tpu_custom_call.1} parent=1 // pred_check
      _
    $region27: #{tpu_custom_call.1} parent=1 // pred_check_branch
      %66 = sbr.rel (0) target = $region29
    $region28: #{tpu_custom_call.1} parent=1 // pred_region
      %67 = dma.done [#allocation6], 256
    $region29: #{tpu_custom_call.1} parent=1 // pred_fallthru
      _
    // Predicated region
    $region30: #{tpu_custom_call.1} parent=1 // pred_check
      _
    $region31: #{tpu_custom_call.1} parent=1 // pred_check_branch
      %69 = sbr.rel (0) target = $region33
    $region32: #{tpu_custom_call.1} parent=1 // pred_region
      %70 = dma.done [#allocation9], 2048
    $region33: #{tpu_custom_call.1} parent=1 // pred_fallthru
      _
    %v71 = vld [vmem:[#allocation2] sm:$0xff]
    %v72 = vld [vmem:[#allocation2 + $0x8] sm:$0xff]
    %v73 = vld [vmem:[#allocation2 + $0x10] sm:$0xff]
    %v74 = vld [vmem:[#allocation2 + $0x18] sm:$0xff]
    %v75 = vld [vmem:[#allocation2 + $0x20] sm:$0xff]
    %v76 = vld [vmem:[#allocation2 + $0x28] sm:$0xff]
    %v77 = vld [vmem:[#allocation2 + $0x30] sm:$0xff]
    %v78 = vld [vmem:[#allocation2 + $0x38] sm:$0xff]
    %v79 = vld [vmem:[#allocation2 + $0x40] sm:$0xff]
    %v80 = vld [vmem:[#allocation2 + $0x48] sm:$0xff]
    %v81 = vld [vmem:[#allocation2 + $0x50] sm:$0xff]
    %v82 = vld [vmem:[#allocation2 + $0x58] sm:$0xff]
    %v83 = vld [vmem:[#allocation2 + $0x60] sm:$0xff]
    %v84 = vld [vmem:[#allocation2 + $0x68] sm:$0xff]
    %v85 = vld [vmem:[#allocation2 + $0x70] sm:$0xff]
    %v86 = vld [vmem:[#allocation2 + $0x78] sm:$0xff]
    %v87 = vld [vmem:[#allocation5] sm:$0xff]
    %v88 = vld [vmem:[#allocation5 + $0x8] sm:$0xff]
    %v89 = vld [vmem:[#allocation5 + $0x10] sm:$0xff]
    %v90 = vld [vmem:[#allocation5 + $0x18] sm:$0xff]
    %v91 = vld [vmem:[#allocation5 + $0x20] sm:$0xff]
    %v92 = vld [vmem:[#allocation5 + $0x28] sm:$0xff]
    %v93 = vld [vmem:[#allocation5 + $0x30] sm:$0xff]
    %v94 = vld [vmem:[#allocation5 + $0x38] sm:$0xff]
    %v95 = vld [vmem:[#allocation5 + $0x40] sm:$0xff]
    %v96 = vld [vmem:[#allocation5 + $0x48] sm:$0xff]
    %v97 = vld [vmem:[#allocation5 + $0x50] sm:$0xff]
    %v98 = vld [vmem:[#allocation5 + $0x58] sm:$0xff]
    %v99 = vld [vmem:[#allocation5 + $0x60] sm:$0xff]
    %v100 = vld [vmem:[#allocation5 + $0x68] sm:$0xff]
    %v101 = vld [vmem:[#allocation5 + $0x70] sm:$0xff]
    %v102 = vld [vmem:[#allocation5 + $0x78] sm:$0xff]
    %v103 = vld [vmem:[#allocation5 + $0x80] sm:$0xff]
    %v104 = vld [vmem:[#allocation5 + $0x88] sm:$0xff]
    %v105 = vld [vmem:[#allocation5 + $0x90] sm:$0xff]
    %v106 = vld [vmem:[#allocation5 + $0x98] sm:$0xff]
    %v107 = vld [vmem:[#allocation5 + $0xa0] sm:$0xff]
    %v108 = vld [vmem:[#allocation5 + $0xa8] sm:$0xff]
    %v109 = vld [vmem:[#allocation5 + $0xb0] sm:$0xff]
    %v110 = vld [vmem:[#allocation5 + $0xb8] sm:$0xff]
    %v111 = vld [vmem:[#allocation5 + $0xc0] sm:$0xff]
    %v112 = vld [vmem:[#allocation5 + $0xc8] sm:$0xff]
    %v113 = vld [vmem:[#allocation5 + $0xd0] sm:$0xff]
    %v114 = vld [vmem:[#allocation5 + $0xd8] sm:$0xff]
    %v115 = vld [vmem:[#allocation5 + $0xe0] sm:$0xff]
    %v116 = vld [vmem:[#allocation5 + $0xe8] sm:$0xff]
    %v117 = vld [vmem:[#allocation5 + $0xf0] sm:$0xff]
    %v118 = vld [vmem:[#allocation5 + $0xf8] sm:$0xff]
    %v119 = vld [vmem:[#allocation5 + $0x100] sm:$0xff]
    %v120 = vld [vmem:[#allocation5 + $0x108] sm:$0xff]
    %v121 = vld [vmem:[#allocation5 + $0x110] sm:$0xff]
    %v122 = vld [vmem:[#allocation5 + $0x118] sm:$0xff]
    %v123 = vld [vmem:[#allocation5 + $0x120] sm:$0xff]
    %v124 = vld [vmem:[#allocation5 + $0x128] sm:$0xff]
    %v125 = vld [vmem:[#allocation5 + $0x130] sm:$0xff]
    %v126 = vld [vmem:[#allocation5 + $0x138] sm:$0xff]
    %v127 = vld [vmem:[#allocation5 + $0x140] sm:$0xff]
    %v128 = vld [vmem:[#allocation5 + $0x148] sm:$0xff]
    %v129 = vld [vmem:[#allocation5 + $0x150] sm:$0xff]
    %v130 = vld [vmem:[#allocation5 + $0x158] sm:$0xff]
    %v131 = vld [vmem:[#allocation5 + $0x160] sm:$0xff]
    %v132 = vld [vmem:[#allocation5 + $0x168] sm:$0xff]
    %v133 = vld [vmem:[#allocation5 + $0x170] sm:$0xff]
    %v134 = vld [vmem:[#allocation5 + $0x178] sm:$0xff]
    %v135 = vld [vmem:[#allocation5 + $0x180] sm:$0xff]
    %v136 = vld [vmem:[#allocation5 + $0x188] sm:$0xff]
    %v137 = vld [vmem:[#allocation5 + $0x190] sm:$0xff]
    %v138 = vld [vmem:[#allocation5 + $0x198] sm:$0xff]
    %v139 = vld [vmem:[#allocation5 + $0x1a0] sm:$0xff]
    %v140 = vld [vmem:[#allocation5 + $0x1a8] sm:$0xff]
    %v141 = vld [vmem:[#allocation5 + $0x1b0] sm:$0xff]
    %v142 = vld [vmem:[#allocation5 + $0x1b8] sm:$0xff]
    %v143 = vld [vmem:[#allocation5 + $0x1c0] sm:$0xff]
    %v144 = vld [vmem:[#allocation5 + $0x1c8] sm:$0xff]
    %v145 = vld [vmem:[#allocation5 + $0x1d0] sm:$0xff]
    %v146 = vld [vmem:[#allocation5 + $0x1d8] sm:$0xff]
    %v147 = vld [vmem:[#allocation5 + $0x1e0] sm:$0xff]
    %v148 = vld [vmem:[#allocation5 + $0x1e8] sm:$0xff]
    %v149 = vld [vmem:[#allocation5 + $0x1f0] sm:$0xff]
    %v150 = vld [vmem:[#allocation5 + $0x1f8] sm:$0xff]
    %v151 = vld [vmem:[#allocation7] ss:$8 sm:$0x3]
    %s152 = scalar_lea.vmem [#allocation7], 1
    %v153 = vld [vmem:[%s152] ss:$8 sm:$0x3]
    %s154 = scalar_lea.vmem [#allocation7], 2
    %v155 = vld [vmem:[%s154] ss:$8 sm:$0x3]
    %v157 = vlaneseq
    %v158 = vshrl.u32 %v157, 7
    %v159 = vsub.s32 0, %v158
    %v160 = vrot.slane %v151, %v159
    %v161 = vlaneseq
    %v162 = vshrl.u32 %v161, 7
    %v163 = vsub.s32 1, %v162
    %v164 = vrot.slane %v151, %v163
    %167 = vmatprep.subr.mxu0 %v118
    %168 = vmatpush1.msra.mxu0 %v117
    %169 = vmatprep.subr.mxu0 %v116
    %170 = vmatpush1.msra.mxu0 %v115
    %171 = vmatprep.subr.mxu0 %v114
    %172 = vmatpush1.msra.mxu0 %v113
    %173 = vmatprep.subr.mxu0 %v112
    %174 = vmatpush1.msra.mxu0 %v111
    %175 = vmatprep.subr.mxu0 %v110
    %176 = vmatpush1.msra.mxu0 %v109
    %177 = vmatprep.subr.mxu0 %v108
    %178 = vmatpush1.msra.mxu0 %v107
    %179 = vmatprep.subr.mxu0 %v106
    %180 = vmatpush1.msra.mxu0 %v105
    %181 = vmatprep.subr.mxu0 %v104
    %182 = vmatpush1.msra.mxu0 %v103
    %183 = vmatprep.subr.mxu0 %v102
    %184 = vmatpush1.msra.mxu0 %v101
    %185 = vmatprep.subr.mxu0 %v100
    %186 = vmatpush1.msra.mxu0 %v99
    %187 = vmatprep.subr.mxu0 %v98
    %188 = vmatpush1.msra.mxu0 %v97
    %189 = vmatprep.subr.mxu0 %v96
    %190 = vmatpush1.msra.mxu0 %v95
    %191 = vmatprep.subr.mxu0 %v94
    %192 = vmatpush1.msra.mxu0 %v93
    %193 = vmatprep.subr.mxu0 %v92
    %194 = vmatpush1.msra.mxu0 %v91
    %195 = vmatprep.subr.mxu0 %v90
    %196 = vmatpush1.msra.mxu0 %v89
    %197 = vmatprep.subr.mxu0 %v88
    %198 = vmatpush1.msra.mxu0 %v87
    %199 = vmatprep.subr.mxu0 %v150
    %200 = vmatpush2.msra.mxu0 %v149
    %201 = vmatprep.subr.mxu0 %v148
    %202 = vmatpush2.msra.mxu0 %v147
    %203 = vmatprep.subr.mxu0 %v146
    %204 = vmatpush2.msra.mxu0 %v145
    %205 = vmatprep.subr.mxu0 %v144
    %206 = vmatpush2.msra.mxu0 %v143
    %207 = vmatprep.subr.mxu0 %v142
    %208 = vmatpush2.msra.mxu0 %v141
    %209 = vmatprep.subr.mxu0 %v140
    %210 = vmatpush2.msra.mxu0 %v139
    %211 = vmatprep.subr.mxu0 %v138
    %212 = vmatpush2.msra.mxu0 %v137
    %213 = vmatprep.subr.mxu0 %v136
    %214 = vmatpush2.msra.mxu0 %v135
    %215 = vmatprep.subr.mxu0 %v134
    %216 = vmatpush2.msra.mxu0 %v133
    %217 = vmatprep.subr.mxu0 %v132
    %218 = vmatpush2.msra.mxu0 %v131
    %219 = vmatprep.subr.mxu0 %v130
    %220 = vmatpush2.msra.mxu0 %v129
    %221 = vmatprep.subr.mxu0 %v128
    %222 = vmatpush2.msra.mxu0 %v127
    %223 = vmatprep.subr.mxu0 %v126
    %224 = vmatpush2.msra.mxu0 %v125
    %225 = vmatprep.subr.mxu0 %v124
    %226 = vmatpush2.msra.mxu0 %v123
    %227 = vmatprep.subr.mxu0 %v122
    %228 = vmatpush2.msra.mxu0 %v121
    %229 = vmatprep.subr.mxu0 %v120
    %230 = vmatpush2.msra.mxu0 %v119
    %231 = vmatprep.mubr.f32.mxu0 %v72
    %232 = vmatmul.mubr.f32.gmra.mxu0 %v71
    %v233 = vpop.f32.mrf.mxu0
    %v234 = vadd.f32 %v160, %v233
    %v235 = vpop.f32.mrf.mxu0
    %v236 = vadd.f32 %v164, %v235
    %237 = vmatprep.mubr.f32.mxu0 %v74
    %238 = vmatmul.mubr.f32.gmra.mxu0 %v73
    %v239 = vpop.f32.mrf.mxu0
    %v240 = vadd.f32 %v160, %v239
    %v241 = vpop.f32.mrf.mxu0
    %v242 = vadd.f32 %v164, %v241
    %243 = vmatprep.mubr.f32.mxu0 %v76
    %244 = vmatmul.mubr.f32.gmra.mxu0 %v75
    %v245 = vpop.f32.mrf.mxu0
    %v246 = vadd.f32 %v160, %v245
    %v247 = vpop.f32.mrf.mxu0
    %v248 = vadd.f32 %v164, %v247
    %249 = vmatprep.mubr.f32.mxu0 %v78
    %250 = vmatmul.mubr.f32.gmra.mxu0 %v77
    %v251 = vpop.f32.mrf.mxu0
    %v252 = vadd.f32 %v160, %v251
    %v253 = vpop.f32.mrf.mxu0
    %v254 = vadd.f32 %v164, %v253
    %255 = vmatprep.mubr.f32.mxu0 %v80
    %256 = vmatmul.mubr.f32.gmra.mxu0 %v79
    %v257 = vpop.f32.mrf.mxu0
    %v258 = vadd.f32 %v160, %v257
    %v259 = vpop.f32.mrf.mxu0
    %v260 = vadd.f32 %v164, %v259
    %261 = vmatprep.mubr.f32.mxu0 %v82
    %262 = vmatmul.mubr.f32.gmra.mxu0 %v81
    %v263 = vpop.f32.mrf.mxu0
    %v264 = vadd.f32 %v160, %v263
    %v265 = vpop.f32.mrf.mxu0
    %v266 = vadd.f32 %v164, %v265
    %267 = vmatprep.mubr.f32.mxu0 %v84
    %268 = vmatmul.mubr.f32.gmra.mxu0 %v83
    %v269 = vpop.f32.mrf.mxu0
    %v270 = vadd.f32 %v160, %v269
    %v271 = vpop.f32.mrf.mxu0
    %v272 = vadd.f32 %v164, %v271
    %273 = vmatprep.mubr.f32.mxu0 %v86
    %274 = vmatmul.mubr.f32.gmra.mxu0 %v85
    %v275 = vpop.f32.mrf.mxu0
    %v276 = vadd.f32 %v160, %v275
    %v277 = vpop.f32.mrf.mxu0
    %v278 = vadd.f32 %v164, %v277
    %279 = vdwg.mxu0
    %v280 = vld [vmem:[#allocation8] sm:$0xff]
    %v281 = vld [vmem:[#allocation8 + $0x8] sm:$0xff]
    %v282 = vld [vmem:[#allocation8 + $0x10] sm:$0xff]
    %v283 = vld [vmem:[#allocation8 + $0x18] sm:$0xff]
    %v284 = vld [vmem:[#allocation8 + $0x20] sm:$0xff]
    %v285 = vld [vmem:[#allocation8 + $0x28] sm:$0xff]
    %v286 = vld [vmem:[#allocation8 + $0x30] sm:$0xff]
    %v287 = vld [vmem:[#allocation8 + $0x38] sm:$0xff]
    %v288 = vld [vmem:[#allocation8 + $0x40] sm:$0xff]
    %v289 = vld [vmem:[#allocation8 + $0x48] sm:$0xff]
    %v290 = vld [vmem:[#allocation8 + $0x50] sm:$0xff]
    %v291 = vld [vmem:[#allocation8 + $0x58] sm:$0xff]
    %v292 = vld [vmem:[#allocation8 + $0x60] sm:$0xff]
    %v293 = vld [vmem:[#allocation8 + $0x68] sm:$0xff]
    %v294 = vld [vmem:[#allocation8 + $0x70] sm:$0xff]
    %v295 = vld [vmem:[#allocation8 + $0x78] sm:$0xff]
    %v296 = vadd.f32 %v234, %v280
    %v297 = vadd.f32 %v236, %v281
    %v298 = vadd.f32 %v240, %v282
    %v299 = vadd.f32 %v242, %v283
    %v300 = vadd.f32 %v246, %v284
    %v301 = vadd.f32 %v248, %v285
    %v302 = vadd.f32 %v252, %v286
    %v303 = vadd.f32 %v254, %v287
    %v304 = vadd.f32 %v258, %v288
    %v305 = vadd.f32 %v260, %v289
    %v306 = vadd.f32 %v264, %v290
    %v307 = vadd.f32 %v266, %v291
    %v308 = vadd.f32 %v270, %v292
    %v309 = vadd.f32 %v272, %v293
    %v310 = vadd.f32 %v276, %v294
    %v311 = vadd.f32 %v278, %v295
    %v312 = vadd.f32 %v296, %v297
    %313 = vadd.xlane.f32.xlu0 %v312
    %v314 = vpop.xlane.xlu0 %313
    %v315 = vadd.f32 %v298, %v299
    %316 = vadd.xlane.f32.xlu0 %v315
    %v317 = vpop.xlane.xlu0 %316
    %v318 = vadd.f32 %v300, %v301
    %319 = vadd.xlane.f32.xlu0 %v318
    %v320 = vpop.xlane.xlu0 %319
    %v321 = vadd.f32 %v302, %v303
    %322 = vadd.xlane.f32.xlu0 %v321
    %v323 = vpop.xlane.xlu0 %322
    %v324 = vadd.f32 %v304, %v305
    %325 = vadd.xlane.f32.xlu0 %v324
    %v326 = vpop.xlane.xlu0 %325
    %v327 = vadd.f32 %v306, %v307
    %328 = vadd.xlane.f32.xlu0 %v327
    %v329 = vpop.xlane.xlu0 %328
    %v330 = vadd.f32 %v308, %v309
    %331 = vadd.xlane.f32.xlu0 %v330
    %v332 = vpop.xlane.xlu0 %331
    %v333 = vadd.f32 %v310, %v311
    %334 = vadd.xlane.f32.xlu0 %v333
    %v335 = vpop.xlane.xlu0 %334
    %v336 = vmul.f32 %v314, 0.00390625
    %v337 = vmul.f32 %v317, 0.00390625
    %v338 = vmul.f32 %v320, 0.00390625
    %v339 = vmul.f32 %v323, 0.00390625
    %v340 = vmul.f32 %v326, 0.00390625
    %v341 = vmul.f32 %v329, 0.00390625
    %v342 = vmul.f32 %v332, 0.00390625
    %v343 = vmul.f32 %v335, 0.00390625
    %v344 = vsub.f32 %v296, %v336
    %v345 = vsub.f32 %v297, %v336
    %v346 = vsub.f32 %v298, %v337
    %v347 = vsub.f32 %v299, %v337
    %v348 = vsub.f32 %v300, %v338
    %v349 = vsub.f32 %v301, %v338
    %v350 = vsub.f32 %v302, %v339
    %v351 = vsub.f32 %v303, %v339
    %v352 = vsub.f32 %v304, %v340
    %v353 = vsub.f32 %v305, %v340
    %v354 = vsub.f32 %v306, %v341
    %v355 = vsub.f32 %v307, %v341
    %v356 = vsub.f32 %v308, %v342
    %v357 = vsub.f32 %v309, %v342
    %v358 = vsub.f32 %v310, %v343
    %v359 = vsub.f32 %v311, %v343
    %v360 = vmul.f32 %v344, %v344
    %v361 = vmul.f32 %v345, %v345
    %v362 = vmul.f32 %v346, %v346
    %v363 = vmul.f32 %v347, %v347
    %v364 = vmul.f32 %v348, %v348
    %v365 = vmul.f32 %v349, %v349
    %v366 = vmul.f32 %v350, %v350
    %v367 = vmul.f32 %v351, %v351
    %v368 = vmul.f32 %v352, %v352
    %v369 = vmul.f32 %v353, %v353
    %v370 = vmul.f32 %v354, %v354
    %v371 = vmul.f32 %v355, %v355
    %v372 = vmul.f32 %v356, %v356
    %v373 = vmul.f32 %v357, %v357
    %v374 = vmul.f32 %v358, %v358
    %v375 = vmul.f32 %v359, %v359
    %v376 = vadd.f32 %v360, %v361
    %377 = vadd.xlane.f32.xlu0 %v376
    %v378 = vpop.xlane.xlu0 %377
    %v379 = vadd.f32 %v362, %v363
    %380 = vadd.xlane.f32.xlu0 %v379
    %v381 = vpop.xlane.xlu0 %380
    %v382 = vadd.f32 %v364, %v365
    %383 = vadd.xlane.f32.xlu0 %v382
    %v384 = vpop.xlane.xlu0 %383
    %v385 = vadd.f32 %v366, %v367
    %386 = vadd.xlane.f32.xlu0 %v385
    %v387 = vpop.xlane.xlu0 %386
    %v388 = vadd.f32 %v368, %v369
    %389 = vadd.xlane.f32.xlu0 %v388
    %v390 = vpop.xlane.xlu0 %389
    %v391 = vadd.f32 %v370, %v371
    %392 = vadd.xlane.f32.xlu0 %v391
    %v393 = vpop.xlane.xlu0 %392
    %v394 = vadd.f32 %v372, %v373
    %395 = vadd.xlane.f32.xlu0 %v394
    %v396 = vpop.xlane.xlu0 %395
    %v397 = vadd.f32 %v374, %v375
    %398 = vadd.xlane.f32.xlu0 %v397
    %v399 = vpop.xlane.xlu0 %398
    %v400 = vmul.f32 %v378, 0.00390625
    %v401 = vmul.f32 %v381, 0.00390625
    %v402 = vmul.f32 %v384, 0.00390625
    %v403 = vmul.f32 %v387, 0.00390625
    %v404 = vmul.f32 %v390, 0.00390625
    %v405 = vmul.f32 %v393, 0.00390625
    %v406 = vmul.f32 %v396, 0.00390625
    %v407 = vmul.f32 %v399, 0.00390625
    %v408 = vadd.f32 %v400, 1e-06
    %v409 = vadd.f32 %v401, 1e-06
    %v410 = vadd.f32 %v402, 1e-06
    %v411 = vadd.f32 %v403, 1e-06
    %v412 = vadd.f32 %v404, 1e-06
    %v413 = vadd.f32 %v405, 1e-06
    %v414 = vadd.f32 %v406, 1e-06
    %v415 = vadd.f32 %v407, 1e-06
    %v416 = vrsqrt.pop %v408
    %v417 = vrsqrt.pop %v409
    %v418 = vrsqrt.pop %v410
    %v419 = vrsqrt.pop %v411
    %v420 = vrsqrt.pop %v412
    %v421 = vrsqrt.pop %v413
    %v422 = vrsqrt.pop %v414
    %v423 = vrsqrt.pop %v415
    %v424 = vmul.f32 %v344, %v416
    %v425 = vmul.f32 %v345, %v416
    %v426 = vmul.f32 %v346, %v417
    %v427 = vmul.f32 %v347, %v417
    %v428 = vmul.f32 %v348, %v418
    %v429 = vmul.f32 %v349, %v418
    %v430 = vmul.f32 %v350, %v419
    %v431 = vmul.f32 %v351, %v419
    %v432 = vmul.f32 %v352, %v420
    %v433 = vmul.f32 %v353, %v420
    %v434 = vmul.f32 %v354, %v421
    %v435 = vmul.f32 %v355, %v421
    %v436 = vmul.f32 %v356, %v422
    %v437 = vmul.f32 %v357, %v422
    %v438 = vmul.f32 %v358, %v423
    %v439 = vmul.f32 %v359, %v423
    %v441 = vlaneseq
    %v442 = vshrl.u32 %v441, 7
    %v443 = vsub.s32 0, %v442
    %v444 = vrot.slane %v153, %v443
    %v445 = vlaneseq
    %v446 = vshrl.u32 %v445, 7
    %v447 = vsub.s32 1, %v446
    %v448 = vrot.slane %v153, %v447
    %v451 = vmul.f32 %v424, %v444
    %v452 = vmul.f32 %v425, %v448
    %v453 = vmul.f32 %v426, %v444
    %v454 = vmul.f32 %v427, %v448
    %v455 = vmul.f32 %v428, %v444
    %v456 = vmul.f32 %v429, %v448
    %v457 = vmul.f32 %v430, %v444
    %v458 = vmul.f32 %v431, %v448
    %v459 = vmul.f32 %v432, %v444
    %v460 = vmul.f32 %v433, %v448
    %v461 = vmul.f32 %v434, %v444
    %v462 = vmul.f32 %v435, %v448
    %v463 = vmul.f32 %v436, %v444
    %v464 = vmul.f32 %v437, %v448
    %v465 = vmul.f32 %v438, %v444
    %v466 = vmul.f32 %v439, %v448
    %v468 = vlaneseq
    %v469 = vshrl.u32 %v468, 7
    %v470 = vsub.s32 0, %v469
    %v471 = vrot.slane %v155, %v470
    %v472 = vlaneseq
    %v473 = vshrl.u32 %v472, 7
    %v474 = vsub.s32 1, %v473
    %v475 = vrot.slane %v155, %v474
    %v478 = vadd.f32 %v451, %v471
    %v479 = vadd.f32 %v452, %v475
    %v480 = vadd.f32 %v453, %v471
    %v481 = vadd.f32 %v454, %v475
    %v482 = vadd.f32 %v455, %v471
    %v483 = vadd.f32 %v456, %v475
    %v484 = vadd.f32 %v457, %v471
    %v485 = vadd.f32 %v458, %v475
    %v486 = vadd.f32 %v459, %v471
    %v487 = vadd.f32 %v460, %v475
    %v488 = vadd.f32 %v461, %v471
    %v489 = vadd.f32 %v462, %v475
    %v490 = vadd.f32 %v463, %v471
    %v491 = vadd.f32 %v464, %v475
    %v492 = vadd.f32 %v465, %v471
    %v493 = vadd.f32 %v466, %v475
    %494 = vst [vmem:[#allocation10] sm:$0xff] %v478
    %495 = vst [vmem:[#allocation10 + $0x8] sm:$0xff] %v479
    %496 = vst [vmem:[#allocation10 + $0x10] sm:$0xff] %v480
    %497 = vst [vmem:[#allocation10 + $0x18] sm:$0xff] %v481
    %498 = vst [vmem:[#allocation10 + $0x20] sm:$0xff] %v482
    %499 = vst [vmem:[#allocation10 + $0x28] sm:$0xff] %v483
    %500 = vst [vmem:[#allocation10 + $0x30] sm:$0xff] %v484
    %501 = vst [vmem:[#allocation10 + $0x38] sm:$0xff] %v485
    %502 = vst [vmem:[#allocation10 + $0x40] sm:$0xff] %v486
    %503 = vst [vmem:[#allocation10 + $0x48] sm:$0xff] %v487
    %504 = vst [vmem:[#allocation10 + $0x50] sm:$0xff] %v488
    %505 = vst [vmem:[#allocation10 + $0x58] sm:$0xff] %v489
    %506 = vst [vmem:[#allocation10 + $0x60] sm:$0xff] %v490
    %507 = vst [vmem:[#allocation10 + $0x68] sm:$0xff] %v491
    %508 = vst [vmem:[#allocation10 + $0x70] sm:$0xff] %v492
    %509 = vst [vmem:[#allocation10 + $0x78] sm:$0xff] %v493
    // Predicated region
    $region34: #{tpu_custom_call.1} parent=1 // pred_check
      _
    $region35: #{tpu_custom_call.1} parent=1 // pred_check_branch
      %511 = sbr.rel (0) target = $region37
    $region36: #{tpu_custom_call.1} parent=1 // pred_region
      %s513 = ssub.s32 2048, 2048
      %514 = vsyncadd [#allocation4], %s513
      %s515 = sshll.u32 [#allocation10], 4
      %s516 = int_to_ptr.vmem [resolvable:$true] %s515
      %521 = dma.vmem_to_hbm [thread:$0]  %s516, 2048, %s4, [#allocation4], 256, 256, 16
    $region37: #{tpu_custom_call.1} parent=1 // pred_fallthru
      _
    // Predicated region
    $region38: #{tpu_custom_call.1} parent=1 // pred_check
      _
    $region39: #{tpu_custom_call.1} parent=1 // pred_check_branch
      %523 = sbr.rel (0) target = $region41
    $region40: #{tpu_custom_call.1} parent=1 // pred_region
      %524 = dma.done [#allocation4], 2048
    $region41: #{tpu_custom_call.1} parent=1 // pred_fallthru
      _
    %525 = vsyncpa [#allocation3], 1
    %526 = vsyncpa [#allocation6], 1
    %527 = vsyncpa [#allocation9], 1
    %528 = vsyncpa [#allocation4], 1

// kernel: tpu_custom_call.1
$region0: #{tpu_custom_call.1}
  #allocation0 [shape = 'u32[]', space=smem, size = 0x4, offset = 0x4, fixed_abs, tag = 'smem constant byte address 0x4 - core index']
  #allocation1 [shape = 'u32[144,128]{1,0:T(1,128)}', space=vmem, size = 0x12000, scoped, tag = 'internal scratch']
  %s0 = inlined_call_operand.hbm [shape: f32[64,256], index: 0, kind: input, shape index: {}]
  %s1 = inlined_call_operand.hbm [shape: f32[256,256], index: 1, kind: input, shape index: {}]
  %s2 = inlined_call_operand.hbm [shape: f32[8,256], index: 2, kind: input, shape index: {}]
  %s3 = inlined_call_operand.hbm [shape: f32[64,256], index: 3, kind: input, shape index: {}]
  %s4 = inlined_call_operand.hbm [shape: f32[64,256], index: 4, kind: output, shape index: {}]
  %s5 = sld [smem:[#allocation0]]
  $region42: #{tpu_custom_call.1} parent=0
    _
  %s7 = ssub.s32 1, %s5
  %s8 = scalar_select 0, %s7, %s5
  $region1: #{tpu_custom_call.1} parent=0
    #allocation2 [shape = 'u8[65536]{0}', space=vmem, size = 0x10000, scoped, tag = 'input window, operand 0, single buffered']
    #allocation3 [shape = 's32[1]{0}', space=sflag, size = 0x4, scoped, tag = 'scoped memory for tpu_custom_call.1']
    #allocation4 [shape = 's32[1]{0}', space=sflag, size = 0x4, scoped, tag = 'scoped memory for tpu_custom_call.1']
    #allocation5 [shape = 'u8[262144]{0}', space=vmem, size = 0x40000, scoped, tag = 'input window, operand 1, single buffered']
    #allocation6 [shape = 's32[1]{0}', space=sflag, size = 0x4, scoped, tag = 'scoped memory for tpu_custom_call.1']
    #allocation7 [shape = 'u8[8192]{0}', space=vmem, size = 0x2000, scoped, tag = 'input window, operand 2, single buffered']
    #allocation8 [shape = 'u8[65536]{0}', space=vmem, size = 0x10000, scoped, tag = 'input window, operand 3, single buffered']
    #allocation9 [shape = 's32[1]{0}', space=sflag, size = 0x4, scoped, tag = 'scoped memory for tpu_custom_call.1']
    #allocation10 [shape = 'u8[65536]{0}', space=vmem, size = 0x10000, scoped, tag = 'output window, operand 0, single buffered']
    %9 = vsyncpa [#allocation3], 0
    %10 = vsyncpa [#allocation6], 0
    %11 = vsyncpa [#allocation9], 0
    %12 = vsyncpa [#allocation4], 0
    // Predicated region
    $region2: #{tpu_custom_call.1} parent=1 // pred_check
      _
    $region3: #{tpu_custom_call.1} parent=1 // pred_check_branch
      %14 = sbr.rel (0) target = $region5
    $region4: #{tpu_custom_call.1} parent=1 // pred_region
      %s16 = ssub.s32 2048, 2048
      %17 = vsyncadd [#allocation3], %s16
      %s18 = sshll.u32 [#allocation2], 4
      %s19 = int_to_ptr.vmem [resolvable:$true] %s18
      %24 = dma.hbm_to_vmem [thread:$0]  %s0, 2048, %s19, [#allocation3], 256, 256, 16
    $region5: #{tpu_custom_call.1} parent=1 // pred_fallthru
      _
    // Predicated region
    $region6: #{tpu_custom_call.1} parent=1 // pred_check
      _
    $region7: #{tpu_custom_call.1} parent=1 // pred_check_branch
      %26 = sbr.rel (0) target = $region9
    $region8: #{tpu_custom_call.1} parent=1 // pred_region
      %s28 = ssub.s32 8192, 8192
      %29 = vsyncadd [#allocation6], %s28
      %s30 = sshll.u32 [#allocation5], 4
      %s31 = int_to_ptr.vmem [resolvable:$true] %s30
      %36 = dma.hbm_to_vmem [thread:$0]  %s1, 8192, %s31, [#allocation6], 256, 256, 16
    $region9: #{tpu_custom_call.1} parent=1 // pred_fallthru
      _
    // Predicated region
    $region10: #{tpu_custom_call.1} parent=1 // pred_check
      _
    $region11: #{tpu_custom_call.1} parent=1 // pred_check_branch
      %38 = sbr.rel (0) target = $region13
    $region12: #{tpu_custom_call.1} parent=1 // pred_region
      %s40 = ssub.s32 256, 256
      %41 = vsyncadd [#allocation6], %s40
      %s43 = sshll.u32 [#allocation7], 4
      %s44 = int_to_ptr.vmem [resolvable:$true] %s43
      %46 = dma.hbm_to_vmem [thread:$0]  %s2, 256, %s44, [#allocation6]
    $region13: #{tpu_custom_call.1} parent=1 // pred_fallthru
      _
    // Predicated region
    $region14: #{tpu_custom_call.1} parent=1 // pred_check
      _
    $region15: #{tpu_custom_call.1} parent=1 // pred_check_branch
      %48 = sbr.rel (0) target = $region17
    $region16: #{tpu_custom_call.1} parent=1 // pred_region
      %s50 = ssub.s32 2048, 2048
      %51 = vsyncadd [#allocation9], %s50
      %s52 = sshll.u32 [#allocation8], 4
      %s53 = int_to_ptr.vmem [resolvable:$true] %s52
      %58 = dma.hbm_to_vmem [thread:$0]  %s3, 2048, %s53, [#allocation9], 256, 256, 16
    $region17: #{tpu_custom_call.1} parent=1 // pred_fallthru
      _
    // Predicated region
    $region18: #{tpu_custom_call.1} parent=1 // pred_check
      _
    $region19: #{tpu_custom_call.1} parent=1 // pred_check_branch
      %60 = sbr.rel (0) target = $region21
    $region20: #{tpu_custom_call.1} parent=1 // pred_region
      %61 = dma.done [#allocation3], 2048
    $region21: #{tpu_custom_call.1} parent=1 // pred_fallthru
      _
    // Predicated region
    $region22: #{tpu_custom_call.1} parent=1 // pred_check
      _
    $region23: #{tpu_custom_call.1} parent=1 // pred_check_branch
      %63 = sbr.rel (0) target = $region25
    $region24: #{tpu_custom_call.1} parent=1 // pred_region
      %64 = dma.done [#allocation6], 8192
    $region25: #{tpu_custom_call.1} parent=1 // pred_fallthru
      _
    // Predicated region
    $region26: #{tpu_custom_call.1} parent=1 // pred_check
      _
    $region27: #{tpu_custom_call.1} parent=1 // pred_check_branch
      %66 = sbr.rel (0) target = $region29
    $region28: #{tpu_custom_call.1} parent=1 // pred_region
      %67 = dma.done [#allocation6], 256
    $region29: #{tpu_custom_call.1} parent=1 // pred_fallthru
      _
    // Predicated region
    $region30: #{tpu_custom_call.1} parent=1 // pred_check
      _
    $region31: #{tpu_custom_call.1} parent=1 // pred_check_branch
      %69 = sbr.rel (0) target = $region33
    $region32: #{tpu_custom_call.1} parent=1 // pred_region
      %70 = dma.done [#allocation9], 2048
    $region33: #{tpu_custom_call.1} parent=1 // pred_fallthru
      _
    %v71 = vld [vmem:[#allocation2] sm:$0xff]
    %v72 = vld [vmem:[#allocation2 + $0x8] sm:$0xff]
    %v73 = vld [vmem:[#allocation2 + $0x10] sm:$0xff]
    %v74 = vld [vmem:[#allocation2 + $0x18] sm:$0xff]
    %v75 = vld [vmem:[#allocation2 + $0x20] sm:$0xff]
    %v76 = vld [vmem:[#allocation2 + $0x28] sm:$0xff]
    %v77 = vld [vmem:[#allocation2 + $0x30] sm:$0xff]
    %v78 = vld [vmem:[#allocation2 + $0x38] sm:$0xff]
    %v79 = vld [vmem:[#allocation2 + $0x40] sm:$0xff]
    %v80 = vld [vmem:[#allocation2 + $0x48] sm:$0xff]
    %v81 = vld [vmem:[#allocation2 + $0x50] sm:$0xff]
    %v82 = vld [vmem:[#allocation2 + $0x58] sm:$0xff]
    %v83 = vld [vmem:[#allocation2 + $0x60] sm:$0xff]
    %v84 = vld [vmem:[#allocation2 + $0x68] sm:$0xff]
    %v85 = vld [vmem:[#allocation2 + $0x70] sm:$0xff]
    %v86 = vld [vmem:[#allocation2 + $0x78] sm:$0xff]
    %v87 = vld [vmem:[#allocation5] sm:$0xff]
    %v88 = vld [vmem:[#allocation5 + $0x8] sm:$0xff]
    %v89 = vld [vmem:[#allocation5 + $0x10] sm:$0xff]
    %v90 = vld [vmem:[#allocation5 + $0x18] sm:$0xff]
    %v91 = vld [vmem:[#allocation5 + $0x20] sm:$0xff]
    %v92 = vld [vmem:[#allocation5 + $0x28] sm:$0xff]
    %v93 = vld [vmem:[#allocation5 + $0x30] sm:$0xff]
    %v94 = vld [vmem:[#allocation5 + $0x38] sm:$0xff]
    %v95 = vld [vmem:[#allocation5 + $0x40] sm:$0xff]
    %v96 = vld [vmem:[#allocation5 + $0x48] sm:$0xff]
    %v97 = vld [vmem:[#allocation5 + $0x50] sm:$0xff]
    %v98 = vld [vmem:[#allocation5 + $0x58] sm:$0xff]
    %v99 = vld [vmem:[#allocation5 + $0x60] sm:$0xff]
    %v100 = vld [vmem:[#allocation5 + $0x68] sm:$0xff]
    %v101 = vld [vmem:[#allocation5 + $0x70] sm:$0xff]
    %v102 = vld [vmem:[#allocation5 + $0x78] sm:$0xff]
    %v103 = vld [vmem:[#allocation5 + $0x80] sm:$0xff]
    %v104 = vld [vmem:[#allocation5 + $0x88] sm:$0xff]
    %v105 = vld [vmem:[#allocation5 + $0x90] sm:$0xff]
    %v106 = vld [vmem:[#allocation5 + $0x98] sm:$0xff]
    %v107 = vld [vmem:[#allocation5 + $0xa0] sm:$0xff]
    %v108 = vld [vmem:[#allocation5 + $0xa8] sm:$0xff]
    %v109 = vld [vmem:[#allocation5 + $0xb0] sm:$0xff]
    %v110 = vld [vmem:[#allocation5 + $0xb8] sm:$0xff]
    %v111 = vld [vmem:[#allocation5 + $0xc0] sm:$0xff]
    %v112 = vld [vmem:[#allocation5 + $0xc8] sm:$0xff]
    %v113 = vld [vmem:[#allocation5 + $0xd0] sm:$0xff]
    %v114 = vld [vmem:[#allocation5 + $0xd8] sm:$0xff]
    %v115 = vld [vmem:[#allocation5 + $0xe0] sm:$0xff]
    %v116 = vld [vmem:[#allocation5 + $0xe8] sm:$0xff]
    %v117 = vld [vmem:[#allocation5 + $0xf0] sm:$0xff]
    %v118 = vld [vmem:[#allocation5 + $0xf8] sm:$0xff]
    %v119 = vld [vmem:[#allocation5 + $0x100] sm:$0xff]
    %v120 = vld [vmem:[#allocation5 + $0x108] sm:$0xff]
    %v121 = vld [vmem:[#allocation5 + $0x110] sm:$0xff]
    %v122 = vld [vmem:[#allocation5 + $0x118] sm:$0xff]
    %v123 = vld [vmem:[#allocation5 + $0x120] sm:$0xff]
    %v124 = vld [vmem:[#allocation5 + $0x128] sm:$0xff]
    %v125 = vld [vmem:[#allocation5 + $0x130] sm:$0xff]
    %v126 = vld [vmem:[#allocation5 + $0x138] sm:$0xff]
    %v127 = vld [vmem:[#allocation5 + $0x140] sm:$0xff]
    %v128 = vld [vmem:[#allocation5 + $0x148] sm:$0xff]
    %v129 = vld [vmem:[#allocation5 + $0x150] sm:$0xff]
    %v130 = vld [vmem:[#allocation5 + $0x158] sm:$0xff]
    %v131 = vld [vmem:[#allocation5 + $0x160] sm:$0xff]
    %v132 = vld [vmem:[#allocation5 + $0x168] sm:$0xff]
    %v133 = vld [vmem:[#allocation5 + $0x170] sm:$0xff]
    %v134 = vld [vmem:[#allocation5 + $0x178] sm:$0xff]
    %v135 = vld [vmem:[#allocation5 + $0x180] sm:$0xff]
    %v136 = vld [vmem:[#allocation5 + $0x188] sm:$0xff]
    %v137 = vld [vmem:[#allocation5 + $0x190] sm:$0xff]
    %v138 = vld [vmem:[#allocation5 + $0x198] sm:$0xff]
    %v139 = vld [vmem:[#allocation5 + $0x1a0] sm:$0xff]
    %v140 = vld [vmem:[#allocation5 + $0x1a8] sm:$0xff]
    %v141 = vld [vmem:[#allocation5 + $0x1b0] sm:$0xff]
    %v142 = vld [vmem:[#allocation5 + $0x1b8] sm:$0xff]
    %v143 = vld [vmem:[#allocation5 + $0x1c0] sm:$0xff]
    %v144 = vld [vmem:[#allocation5 + $0x1c8] sm:$0xff]
    %v145 = vld [vmem:[#allocation5 + $0x1d0] sm:$0xff]
    %v146 = vld [vmem:[#allocation5 + $0x1d8] sm:$0xff]
    %v147 = vld [vmem:[#allocation5 + $0x1e0] sm:$0xff]
    %v148 = vld [vmem:[#allocation5 + $0x1e8] sm:$0xff]
    %v149 = vld [vmem:[#allocation5 + $0x1f0] sm:$0xff]
    %v150 = vld [vmem:[#allocation5 + $0x1f8] sm:$0xff]
    %v151 = vld [vmem:[#allocation7] ss:$8 sm:$0x3]
    %s152 = scalar_lea.vmem [#allocation7], 1
    %v153 = vld [vmem:[%s152] ss:$8 sm:$0x3]
    %s154 = scalar_lea.vmem [#allocation7], 2
    %v155 = vld [vmem:[%s154] ss:$8 sm:$0x3]
    %v157 = vlaneseq
    %v158 = vshrl.u32 %v157, 7
    %v159 = vsub.s32 0, %v158
    %v160 = vrot.slane %v151, %v159
    %v161 = vlaneseq
    %v162 = vshrl.u32 %v161, 7
    %v163 = vsub.s32 1, %v162
    %v164 = vrot.slane %v151, %v163
    %167 = vmatprep.subr.mxu0 %v118
    %168 = vmatpush1.msra.mxu0 %v117
    %169 = vmatprep.subr.mxu0 %v116
    %170 = vmatpush1.msra.mxu0 %v115
    %171 = vmatprep.subr.mxu0 %v114
    %172 = vmatpush1.msra.mxu0 %v113
    %173 = vmatprep.subr.mxu0 %v112
    %174 = vmatpush1.msra.mxu0 %v111
    %175 = vmatprep.subr.mxu0 %v110
    %176 = vmatpush1.msra.mxu0 %v109
    %177 = vmatprep.subr.mxu0 %v108
    %178 = vmatpush1.msra.mxu0 %v107
    %179 = vmatprep.subr.mxu0 %v106
    %180 = vmatpush1.msra.mxu0 %v105
    %181 = vmatprep.subr.mxu0 %v104
    %182 = vmatpush1.msra.mxu0 %v103
    %183 = vmatprep.subr.mxu0 %v102
    %184 = vmatpush1.msra.mxu0 %v101
    %185 = vmatprep.subr.mxu0 %v100
    %186 = vmatpush1.msra.mxu0 %v99
    %187 = vmatprep.subr.mxu0 %v98
    %188 = vmatpush1.msra.mxu0 %v97
    %189 = vmatprep.subr.mxu0 %v96
    %190 = vmatpush1.msra.mxu0 %v95
    %191 = vmatprep.subr.mxu0 %v94
    %192 = vmatpush1.msra.mxu0 %v93
    %193 = vmatprep.subr.mxu0 %v92
    %194 = vmatpush1.msra.mxu0 %v91
    %195 = vmatprep.subr.mxu0 %v90
    %196 = vmatpush1.msra.mxu0 %v89
    %197 = vmatprep.subr.mxu0 %v88
    %198 = vmatpush1.msra.mxu0 %v87
    %199 = vmatprep.subr.mxu0 %v150
    %200 = vmatpush2.msra.mxu0 %v149
    %201 = vmatprep.subr.mxu0 %v148
    %202 = vmatpush2.msra.mxu0 %v147
    %203 = vmatprep.subr.mxu0 %v146
    %204 = vmatpush2.msra.mxu0 %v145
    %205 = vmatprep.subr.mxu0 %v144
    %206 = vmatpush2.msra.mxu0 %v143
    %207 = vmatprep.subr.mxu0 %v142
    %208 = vmatpush2.msra.mxu0 %v141
    %209 = vmatprep.subr.mxu0 %v140
    %210 = vmatpush2.msra.mxu0 %v139
    %211 = vmatprep.subr.mxu0 %v138
    %212 = vmatpush2.msra.mxu0 %v137
    %213 = vmatprep.subr.mxu0 %v136
    %214 = vmatpush2.msra.mxu0 %v135
    %215 = vmatprep.subr.mxu0 %v134
    %216 = vmatpush2.msra.mxu0 %v133
    %217 = vmatprep.subr.mxu0 %v132
    %218 = vmatpush2.msra.mxu0 %v131
    %219 = vmatprep.subr.mxu0 %v130
    %220 = vmatpush2.msra.mxu0 %v129
    %221 = vmatprep.subr.mxu0 %v128
    %222 = vmatpush2.msra.mxu0 %v127
    %223 = vmatprep.subr.mxu0 %v126
    %224 = vmatpush2.msra.mxu0 %v125
    %225 = vmatprep.subr.mxu0 %v124
    %226 = vmatpush2.msra.mxu0 %v123
    %227 = vmatprep.subr.mxu0 %v122
    %228 = vmatpush2.msra.mxu0 %v121
    %229 = vmatprep.subr.mxu0 %v120
    %230 = vmatpush2.msra.mxu0 %v119
    %231 = vmatprep.mubr.f32.mxu0 %v72
    %232 = vmatmul.mubr.f32.gmra.mxu0 %v71
    %v233 = vpop.f32.mrf.mxu0
    %v234 = vadd.f32 %v160, %v233
    %v235 = vpop.f32.mrf.mxu0
    %v236 = vadd.f32 %v164, %v235
    %237 = vmatprep.mubr.f32.mxu0 %v74
    %238 = vmatmul.mubr.f32.gmra.mxu0 %v73
    %v239 = vpop.f32.mrf.mxu0
    %v240 = vadd.f32 %v160, %v239
    %v241 = vpop.f32.mrf.mxu0
    %v242 = vadd.f32 %v164, %v241
    %243 = vmatprep.mubr.f32.mxu0 %v76
    %244 = vmatmul.mubr.f32.gmra.mxu0 %v75
    %v245 = vpop.f32.mrf.mxu0
    %v246 = vadd.f32 %v160, %v245
    %v247 = vpop.f32.mrf.mxu0
    %v248 = vadd.f32 %v164, %v247
    %249 = vmatprep.mubr.f32.mxu0 %v78
    %250 = vmatmul.mubr.f32.gmra.mxu0 %v77
    %v251 = vpop.f32.mrf.mxu0
    %v252 = vadd.f32 %v160, %v251
    %v253 = vpop.f32.mrf.mxu0
    %v254 = vadd.f32 %v164, %v253
    %255 = vmatprep.mubr.f32.mxu0 %v80
    %256 = vmatmul.mubr.f32.gmra.mxu0 %v79
    %v257 = vpop.f32.mrf.mxu0
    %v258 = vadd.f32 %v160, %v257
    %v259 = vpop.f32.mrf.mxu0
    %v260 = vadd.f32 %v164, %v259
    %261 = vmatprep.mubr.f32.mxu0 %v82
    %262 = vmatmul.mubr.f32.gmra.mxu0 %v81
    %v263 = vpop.f32.mrf.mxu0
    %v264 = vadd.f32 %v160, %v263
    %v265 = vpop.f32.mrf.mxu0
    %v266 = vadd.f32 %v164, %v265
    %267 = vmatprep.mubr.f32.mxu0 %v84
    %268 = vmatmul.mubr.f32.gmra.mxu0 %v83
    %v269 = vpop.f32.mrf.mxu0
    %v270 = vadd.f32 %v160, %v269
    %v271 = vpop.f32.mrf.mxu0
    %v272 = vadd.f32 %v164, %v271
    %273 = vmatprep.mubr.f32.mxu0 %v86
    %274 = vmatmul.mubr.f32.gmra.mxu0 %v85
    %v275 = vpop.f32.mrf.mxu0
    %v276 = vadd.f32 %v160, %v275
    %v277 = vpop.f32.mrf.mxu0
    %v278 = vadd.f32 %v164, %v277
    %279 = vdwg.mxu0
    %v280 = vld [vmem:[#allocation8] sm:$0xff]
    %v281 = vld [vmem:[#allocation8 + $0x8] sm:$0xff]
    %v282 = vld [vmem:[#allocation8 + $0x10] sm:$0xff]
    %v283 = vld [vmem:[#allocation8 + $0x18] sm:$0xff]
    %v284 = vld [vmem:[#allocation8 + $0x20] sm:$0xff]
    %v285 = vld [vmem:[#allocation8 + $0x28] sm:$0xff]
    %v286 = vld [vmem:[#allocation8 + $0x30] sm:$0xff]
    %v287 = vld [vmem:[#allocation8 + $0x38] sm:$0xff]
    %v288 = vld [vmem:[#allocation8 + $0x40] sm:$0xff]
    %v289 = vld [vmem:[#allocation8 + $0x48] sm:$0xff]
    %v290 = vld [vmem:[#allocation8 + $0x50] sm:$0xff]
    %v291 = vld [vmem:[#allocation8 + $0x58] sm:$0xff]
    %v292 = vld [vmem:[#allocation8 + $0x60] sm:$0xff]
    %v293 = vld [vmem:[#allocation8 + $0x68] sm:$0xff]
    %v294 = vld [vmem:[#allocation8 + $0x70] sm:$0xff]
    %v295 = vld [vmem:[#allocation8 + $0x78] sm:$0xff]
    %v296 = vadd.f32 %v234, %v280
    %v297 = vadd.f32 %v236, %v281
    %v298 = vadd.f32 %v240, %v282
    %v299 = vadd.f32 %v242, %v283
    %v300 = vadd.f32 %v246, %v284
    %v301 = vadd.f32 %v248, %v285
    %v302 = vadd.f32 %v252, %v286
    %v303 = vadd.f32 %v254, %v287
    %v304 = vadd.f32 %v258, %v288
    %v305 = vadd.f32 %v260, %v289
    %v306 = vadd.f32 %v264, %v290
    %v307 = vadd.f32 %v266, %v291
    %v308 = vadd.f32 %v270, %v292
    %v309 = vadd.f32 %v272, %v293
    %v310 = vadd.f32 %v276, %v294
    %v311 = vadd.f32 %v278, %v295
    %v312 = vadd.f32 %v296, %v297
    %313 = vadd.xlane.f32.xlu0 %v312
    %v314 = vpop.xlane.xlu0 %313
    %v315 = vadd.f32 %v298, %v299
    %316 = vadd.xlane.f32.xlu0 %v315
    %v317 = vpop.xlane.xlu0 %316
    %v318 = vadd.f32 %v300, %v301
    %319 = vadd.xlane.f32.xlu0 %v318
    %v320 = vpop.xlane.xlu0 %319
    %v321 = vadd.f32 %v302, %v303
    %322 = vadd.xlane.f32.xlu0 %v321
    %v323 = vpop.xlane.xlu0 %322
    %v324 = vadd.f32 %v304, %v305
    %325 = vadd.xlane.f32.xlu0 %v324
    %v326 = vpop.xlane.xlu0 %325
    %v327 = vadd.f32 %v306, %v307
    %328 = vadd.xlane.f32.xlu0 %v327
    %v329 = vpop.xlane.xlu0 %328
    %v330 = vadd.f32 %v308, %v309
    %331 = vadd.xlane.f32.xlu0 %v330
    %v332 = vpop.xlane.xlu0 %331
    %v333 = vadd.f32 %v310, %v311
    %334 = vadd.xlane.f32.xlu0 %v333
    %v335 = vpop.xlane.xlu0 %334
    %v336 = vmul.f32 %v314, 0.00390625
    %v337 = vmul.f32 %v317, 0.00390625
    %v338 = vmul.f32 %v320, 0.00390625
    %v339 = vmul.f32 %v323, 0.00390625
    %v340 = vmul.f32 %v326, 0.00390625
    %v341 = vmul.f32 %v329, 0.00390625
    %v342 = vmul.f32 %v332, 0.00390625
    %v343 = vmul.f32 %v335, 0.00390625
    %v344 = vsub.f32 %v296, %v336
    %v345 = vsub.f32 %v297, %v336
    %v346 = vsub.f32 %v298, %v337
    %v347 = vsub.f32 %v299, %v337
    %v348 = vsub.f32 %v300, %v338
    %v349 = vsub.f32 %v301, %v338
    %v350 = vsub.f32 %v302, %v339
    %v351 = vsub.f32 %v303, %v339
    %v352 = vsub.f32 %v304, %v340
    %v353 = vsub.f32 %v305, %v340
    %v354 = vsub.f32 %v306, %v341
    %v355 = vsub.f32 %v307, %v341
    %v356 = vsub.f32 %v308, %v342
    %v357 = vsub.f32 %v309, %v342
    %v358 = vsub.f32 %v310, %v343
    %v359 = vsub.f32 %v311, %v343
    %v360 = vmul.f32 %v344, %v344
    %v361 = vmul.f32 %v345, %v345
    %v362 = vmul.f32 %v346, %v346
    %v363 = vmul.f32 %v347, %v347
    %v364 = vmul.f32 %v348, %v348
    %v365 = vmul.f32 %v349, %v349
    %v366 = vmul.f32 %v350, %v350
    %v367 = vmul.f32 %v351, %v351
    %v368 = vmul.f32 %v352, %v352
    %v369 = vmul.f32 %v353, %v353
    %v370 = vmul.f32 %v354, %v354
    %v371 = vmul.f32 %v355, %v355
    %v372 = vmul.f32 %v356, %v356
    %v373 = vmul.f32 %v357, %v357
    %v374 = vmul.f32 %v358, %v358
    %v375 = vmul.f32 %v359, %v359
    %v376 = vadd.f32 %v360, %v361
    %377 = vadd.xlane.f32.xlu0 %v376
    %v378 = vpop.xlane.xlu0 %377
    %v379 = vadd.f32 %v362, %v363
    %380 = vadd.xlane.f32.xlu0 %v379
    %v381 = vpop.xlane.xlu0 %380
    %v382 = vadd.f32 %v364, %v365
    %383 = vadd.xlane.f32.xlu0 %v382
    %v384 = vpop.xlane.xlu0 %383
    %v385 = vadd.f32 %v366, %v367
    %386 = vadd.xlane.f32.xlu0 %v385
    %v387 = vpop.xlane.xlu0 %386
    %v388 = vadd.f32 %v368, %v369
    %389 = vadd.xlane.f32.xlu0 %v388
    %v390 = vpop.xlane.xlu0 %389
    %v391 = vadd.f32 %v370, %v371
    %392 = vadd.xlane.f32.xlu0 %v391
    %v393 = vpop.xlane.xlu0 %392
    %v394 = vadd.f32 %v372, %v373
    %395 = vadd.xlane.f32.xlu0 %v394
    %v396 = vpop.xlane.xlu0 %395
    %v397 = vadd.f32 %v374, %v375
    %398 = vadd.xlane.f32.xlu0 %v397
    %v399 = vpop.xlane.xlu0 %398
    %v400 = vmul.f32 %v378, 0.00390625
    %v401 = vmul.f32 %v381, 0.00390625
    %v402 = vmul.f32 %v384, 0.00390625
    %v403 = vmul.f32 %v387, 0.00390625
    %v404 = vmul.f32 %v390, 0.00390625
    %v405 = vmul.f32 %v393, 0.00390625
    %v406 = vmul.f32 %v396, 0.00390625
    %v407 = vmul.f32 %v399, 0.00390625
    %v408 = vadd.f32 %v400, 1e-06
    %v409 = vadd.f32 %v401, 1e-06
    %v410 = vadd.f32 %v402, 1e-06
    %v411 = vadd.f32 %v403, 1e-06
    %v412 = vadd.f32 %v404, 1e-06
    %v413 = vadd.f32 %v405, 1e-06
    %v414 = vadd.f32 %v406, 1e-06
    %v415 = vadd.f32 %v407, 1e-06
    %v416 = vrsqrt.pop %v408
    %v417 = vrsqrt.pop %v409
    %v418 = vrsqrt.pop %v410
    %v419 = vrsqrt.pop %v411
    %v420 = vrsqrt.pop %v412
    %v421 = vrsqrt.pop %v413
    %v422 = vrsqrt.pop %v414
    %v423 = vrsqrt.pop %v415
    %v424 = vmul.f32 %v344, %v416
    %v425 = vmul.f32 %v345, %v416
    %v426 = vmul.f32 %v346, %v417
    %v427 = vmul.f32 %v347, %v417
    %v428 = vmul.f32 %v348, %v418
    %v429 = vmul.f32 %v349, %v418
    %v430 = vmul.f32 %v350, %v419
    %v431 = vmul.f32 %v351, %v419
    %v432 = vmul.f32 %v352, %v420
    %v433 = vmul.f32 %v353, %v420
    %v434 = vmul.f32 %v354, %v421
    %v435 = vmul.f32 %v355, %v421
    %v436 = vmul.f32 %v356, %v422
    %v437 = vmul.f32 %v357, %v422
    %v438 = vmul.f32 %v358, %v423
    %v439 = vmul.f32 %v359, %v423
    %v441 = vlaneseq
    %v442 = vshrl.u32 %v441, 7
    %v443 = vsub.s32 0, %v442
    %v444 = vrot.slane %v153, %v443
    %v445 = vlaneseq
    %v446 = vshrl.u32 %v445, 7
    %v447 = vsub.s32 1, %v446
    %v448 = vrot.slane %v153, %v447
    %v451 = vmul.f32 %v424, %v444
    %v452 = vmul.f32 %v425, %v448
    %v453 = vmul.f32 %v426, %v444
    %v454 = vmul.f32 %v427, %v448
    %v455 = vmul.f32 %v428, %v444
    %v456 = vmul.f32 %v429, %v448
    %v457 = vmul.f32 %v430, %v444
    %v458 = vmul.f32 %v431, %v448
    %v459 = vmul.f32 %v432, %v444
    %v460 = vmul.f32 %v433, %v448
    %v461 = vmul.f32 %v434, %v444
    %v462 = vmul.f32 %v435, %v448
    %v463 = vmul.f32 %v436, %v444
    %v464 = vmul.f32 %v437, %v448
    %v465 = vmul.f32 %v438, %v444
    %v466 = vmul.f32 %v439, %v448
    %v468 = vlaneseq
    %v469 = vshrl.u32 %v468, 7
    %v470 = vsub.s32 0, %v469
    %v471 = vrot.slane %v155, %v470
    %v472 = vlaneseq
    %v473 = vshrl.u32 %v472, 7
    %v474 = vsub.s32 1, %v473
    %v475 = vrot.slane %v155, %v474
    %v478 = vadd.f32 %v451, %v471
    %v479 = vadd.f32 %v452, %v475
    %v480 = vadd.f32 %v453, %v471
    %v481 = vadd.f32 %v454, %v475
    %v482 = vadd.f32 %v455, %v471
    %v483 = vadd.f32 %v456, %v475
    %v484 = vadd.f32 %v457, %v471
    %v485 = vadd.f32 %v458, %v475
    %v486 = vadd.f32 %v459, %v471
    %v487 = vadd.f32 %v460, %v475
    %v488 = vadd.f32 %v461, %v471
    %v489 = vadd.f32 %v462, %v475
    %v490 = vadd.f32 %v463, %v471
    %v491 = vadd.f32 %v464, %v475
    %v492 = vadd.f32 %v465, %v471
    %v493 = vadd.f32 %v466, %v475
    %494 = vst [vmem:[#allocation10] sm:$0xff] %v478
    %495 = vst [vmem:[#allocation10 + $0x8] sm:$0xff] %v479
    %496 = vst [vmem:[#allocation10 + $0x10] sm:$0xff] %v480
    %497 = vst [vmem:[#allocation10 + $0x18] sm:$0xff] %v481
    %498 = vst [vmem:[#allocation10 + $0x20] sm:$0xff] %v482
    %499 = vst [vmem:[#allocation10 + $0x28] sm:$0xff] %v483
    %500 = vst [vmem:[#allocation10 + $0x30] sm:$0xff] %v484
    %501 = vst [vmem:[#allocation10 + $0x38] sm:$0xff] %v485
    %502 = vst [vmem:[#allocation10 + $0x40] sm:$0xff] %v486
    %503 = vst [vmem:[#allocation10 + $0x48] sm:$0xff] %v487
    %504 = vst [vmem:[#allocation10 + $0x50] sm:$0xff] %v488
    %505 = vst [vmem:[#allocation10 + $0x58] sm:$0xff] %v489
    %506 = vst [vmem:[#allocation10 + $0x60] sm:$0xff] %v490
    %507 = vst [vmem:[#allocation10 + $0x68] sm:$0xff] %v491
    %508 = vst [vmem:[#allocation10 + $0x70] sm:$0xff] %v492
    %509 = vst [vmem:[#allocation10 + $0x78] sm:$0xff] %v493
    // Predicated region
    $region34: #{tpu_custom_call.1} parent=1 // pred_check
      _
    $region35: #{tpu_custom_call.1} parent=1 // pred_check_branch
      %511 = sbr.rel (0) target = $region37
    $region36: #{tpu_custom_call.1} parent=1 // pred_region
      %s513 = ssub.s32 2048, 2048
      %514 = vsyncadd [#allocation4], %s513
      %s515 = sshll.u32 [#allocation10], 4
      %s516 = int_to_ptr.vmem [resolvable:$true] %s515
      %521 = dma.vmem_to_hbm [thread:$0]  %s516, 2048, %s4, [#allocation4], 256, 256, 16
    $region37: #{tpu_custom_call.1} parent=1 // pred_fallthru
      _
    // Predicated region
    $region38: #{tpu_custom_call.1} parent=1 // pred_check
      _
    $region39: #{tpu_custom_call.1} parent=1 // pred_check_branch
      %523 = sbr.rel (0) target = $region41
    $region40: #{tpu_custom_call.1} parent=1 // pred_region
      %524 = dma.done [#allocation4], 2048
    $region41: #{tpu_custom_call.1} parent=1 // pred_fallthru
      _
    %525 = vsyncpa [#allocation3], 1
    %526 = vsyncpa [#allocation6], 1
    %527 = vsyncpa [#allocation9], 1
    %528 = vsyncpa [#allocation4], 1

</llo_original>
